<compile_context>
chip_gen: v7x
topology: tpu7x:2x2x1
jax: 0.10.0
libtpu: 0.0.40
codegen_flags: <defaults>
</compile_context>

<pallas_src>
import jax
import jax.numpy as jnp
from jax.experimental import pallas as pl
from jax.experimental.pallas import tpu as pltpu


def _conv1x1_kernel(w_ref, x_ref, o_ref):
    # w_ref: (C_out, C_in)   x_ref: (C_in, HW_blk)   o_ref: (C_out, HW_blk)
    w = w_ref[...].astype(jnp.bfloat16)
    x = x_ref[...].astype(jnp.bfloat16)
    o_ref[...] = jnp.dot(
        w, x, preferred_element_type=jnp.float32
    ).astype(o_ref.dtype)


def conv1x1_pallas(x_nchw, weight_oi, *, hw_block=None):
    """1x1 conv, stride 1, no bias.

    x_nchw:    [N, C_in, H, W] float32
    weight_oi: [C_out, C_in]   float32 (PyTorch Conv2d weight squeezed)
    returns    [N, C_out, H, W] float32
    """
    N, C_in, H, W = x_nchw.shape
    C_out = weight_oi.shape[0]
    HW = H * W

    # NCHW -> (N, C_in, H*W): pure reshape, no transpose / data movement.
    x_flat = x_nchw.reshape(N, C_in, HW)

    # Lane-axis tiling: split HW into >=2 blocks (multiples of 128 lanes) so
    # the grid has a parallel axis with multiple steps -> second v7x TC is not
    # idle. Last (ragged) block is handled by Pallas read-pad / masked store.
    if hw_block is None:
        if HW >= 2 * 128:
            hw_block = (((HW + 1) // 2) + 127) // 128 * 128  # ~HW/2, 128-aligned
        else:
            hw_block = HW
    num_hw_blocks = pl.cdiv(HW, hw_block)

    # Advisory cost for XLA's scheduler (kernel is launch/overhead bound).
    flops = 2 * N * C_out * C_in * HW
    bytes_accessed = int(
        weight_oi.size * weight_oi.dtype.itemsize
        + x_flat.size * x_flat.dtype.itemsize
        + N * C_out * HW * 4
    )

    out_flat = pl.pallas_call(
        _conv1x1_kernel,
        out_shape=jax.ShapeDtypeStruct((N, C_out, HW), jnp.float32),
        grid_spec=pltpu.PrefetchScalarGridSpec(
            num_scalar_prefetch=0,
            grid=(N, num_hw_blocks),
            in_specs=[
                # Full weight, block-invariant -> resident in VMEM.
                pl.BlockSpec((C_out, C_in), lambda n, h: (0, 0)),
                # (C_in, hw_block) slab of image n; batch dim squeezed.
                pl.BlockSpec((None, C_in, hw_block), lambda n, h: (n, 0, h)),
            ],
            out_specs=pl.BlockSpec(
                (None, C_out, hw_block), lambda n, h: (n, 0, h)
            ),
        ),
        compiler_params=pltpu.CompilerParams(
            dimension_semantics=("parallel", "parallel"),
        ),
        cost_estimate=pl.CostEstimate(
            flops=flops, transcendentals=0, bytes_accessed=bytes_accessed
        ),
    )(weight_oi, x_flat)

    # (N, C_out, H*W) -> (N, C_out, H, W): pure reshape again.
    return out_flat.reshape(N, C_out, H, W)


if __name__ == "__main__":
    key = jax.random.PRNGKey(0)
    k_x, k_w = jax.random.split(key)

    # Shapes implied by the module: x99 = [1, 288, 25, 25], Conv2d(288, 64, 1x1)
    N, C_in, H, W = 1, 288, 25, 25
    C_out = 64

    x = jax.random.normal(k_x, (N, C_in, H, W), dtype=jnp.float32)
    # PyTorch weight shape [64, 288, 1, 1] squeezed to [64, 288].
    weight = jax.random.normal(k_w, (C_out, C_in), dtype=jnp.float32) * 0.05

    out = conv1x1_pallas(x, weight)
    out = jax.block_until_ready(out)

    # Reference: plain-JAX channel-mixing einsum (== 1x1 conv, no bias).
    ref = jnp.einsum(
        "nchw,oc->nohw", x, weight, preferred_element_type=jnp.float32
    )
    assert out.shape == (N, C_out, H, W), out.shape
    # bf16 MXU path -> looser tolerance than a bit-exact f32 conv.
    assert jnp.allclose(out, ref, atol=2e-2, rtol=2e-2), float(
        jnp.max(jnp.abs(out - ref))
    )

    print("KERNEL_OK")
</pallas_src>

<mosaic_0001>
module attributes {stable_mosaic.version = 11 : i64} {
  func.func @_conv1x1_kernel(%arg0: i32, %arg1: i32, %arg2: memref<64x288xf32, #tpu.memory_space<vmem>>, %arg3: memref<1x288x384xf32, #tpu.memory_space<vmem>>, %arg4: memref<1x64x384xf32, #tpu.memory_space<vmem>>) attributes {dimension_semantics = [#tpu.dimension_semantics<parallel>, #tpu.dimension_semantics<parallel>], iteration_bounds = array<i64: 1, 2>, scalar_prefetch = 0 : i64, scratch_operands = 0 : i64, tpu.core_type = #tpu.core_type<tc>, window_params = [{pipeline_mode = #tpu.pipeline_mode<synchronous>, transform_indices = @transform_0, window_bounds = array<i64: 64, 288>}, {transform_indices = @transform_1, window_bounds = array<i64: 1, 288, 384>}, {transform_indices = @transform_2, window_bounds = array<i64: 1, 64, 384>}]} {
    %c0 = arith.constant 0 : index
    %c0_0 = arith.constant 0 : index
    %0 = vector.load %arg2[%c0, %c0_0] : memref<64x288xf32, #tpu.memory_space<vmem>>, vector<64x288xf32>
    %1 = arith.truncf %0 : vector<64x288xf32> to vector<64x288xbf16>
    %c0_1 = arith.constant 0 : index
    %c0_2 = arith.constant 0 : index
    %c0_3 = arith.constant 0 : index
    %2 = vector.load %arg3[%c0_1, %c0_2, %c0_3] : memref<1x288x384xf32, #tpu.memory_space<vmem>>, vector<1x288x384xf32>
    %3 = vector.shape_cast %2 : vector<1x288x384xf32> to vector<288x384xf32>
    %4 = arith.truncf %3 : vector<288x384xf32> to vector<288x384xbf16>
    %cst = arith.constant dense<0.000000e+00> : vector<64x384xf32>
    %5 = tpu.matmul %1, %4, %cst {dimension_numbers = #tpu.dot_dimension_numbers<[1], [0], [0], [1], [0, 0, 1, 1], [], []>} : vector<64x288xbf16>, vector<288x384xbf16>, vector<64x384xf32> -> vector<64x384xf32>
    %c0_4 = arith.constant 0 : index
    %c0_5 = arith.constant 0 : index
    %c0_6 = arith.constant 0 : index
    %6 = vector.load %arg4[%c0_4, %c0_5, %c0_6] : memref<1x64x384xf32, #tpu.memory_space<vmem>>, vector<1x64x384xf32>
    %7 = vector.shape_cast %6 : vector<1x64x384xf32> to vector<64x384xf32>
    %8 = vector.shape_cast %5 : vector<64x384xf32> to vector<1x64x384xf32>
    tpu.vector_store %arg4[%c0_4, %c0_5, %c0_6], %8 {strides = array<i32>} : memref<1x64x384xf32, #tpu.memory_space<vmem>>, vector<1x64x384xf32>,
    return
  }
  func.func @transform_0(%arg0: i32, %arg1: i32) -> (i32, i32) {
    %c0_i32 = arith.constant 0 : i32
    %c0_i32_0 = arith.constant 0 : i32
    %c0_i32_1 = arith.constant 0 : i32
    return %c0_i32, %c0_i32_0 : i32, i32
  }
  func.func @transform_1(%arg0: i32, %arg1: i32) -> (i32, i32, i32) {
    %c0_i32 = arith.constant 0 : i32
    %c0_i32_0 = arith.constant 0 : i32
    return %arg0, %c0_i32, %arg1 : i32, i32, i32
  }
  func.func @transform_2(%arg0: i32, %arg1: i32) -> (i32, i32, i32) {
    %c0_i32 = arith.constant 0 : i32
    %c0_i32_0 = arith.constant 0 : i32
    return %arg0, %c0_i32, %arg1 : i32, i32, i32
  }
}

</mosaic_0001>

<llo_original>
// kernel: tpu_custom_call.1
$region0: #{tpu_custom_call.1}
  #allocation0 [shape = 'u32[]', space=smem, size = 0x4, offset = 0x4, fixed_abs, tag = 'smem constant byte address 0x4 - core index']
  #allocation1 [shape = 'u32[144,128]{1,0:T(1,128)}', space=vmem, size = 0x12000, scoped, tag = 'internal scratch']
  %s0 = inlined_call_operand.hbm [shape: f32[64,288], index: 0, kind: input, shape index: {}]
  %s1 = inlined_call_operand.hbm [shape: f32[1,288,625], index: 1, kind: input, shape index: {}]
  %s2 = inlined_call_operand.hbm [shape: f32[1,64,625], index: 2, kind: output, shape index: {}]
  %s3 = sld [smem:[#allocation0]]
  $region49: #{tpu_custom_call.1} parent=0
    _
  %s5 = ssub.s32 1, %s3
  %s6 = scalar_select 0, %s5, %s3
  $region1: #{tpu_custom_call.1} parent=0
    #allocation2 [shape = 'u8[98304]{0}', space=vmem, size = 0x18000, scoped, tag = 'input window, operand 0, single buffered']
    #allocation3 [shape = 's32[2]{0}', space=sflag, size = 0x8, scoped, tag = 'scoped memory for tpu_custom_call.1']
    #allocation4 [shape = 's32[2]{0}', space=sflag, size = 0x8, scoped, tag = 'scoped memory for tpu_custom_call.1']
    #allocation5 [shape = 'u8[884736]{0}', space=vmem, size = 0xd8000, scoped, tag = 'input window, operand 1']
    #allocation6 [shape = 's32[2]{0}', space=sflag, size = 0x8, scoped, tag = 'scoped memory for tpu_custom_call.1']
    #allocation7 [shape = 'u8[196608]{0}', space=vmem, size = 0x30000, scoped, tag = 'output window, operand 0']
    %7 = vsyncpa [#allocation3], 0
    %8 = vsyncpa [#allocation6], 0
    %s9 = scalar_lea.sflag [#allocation6], 1
    %10 = vsyncpa %s9, 0
    %11 = vsyncpa [#allocation4], 0
    %s12 = scalar_lea.sflag [#allocation4], 1
    %13 = vsyncpa %s12, 0
    loop: start=0, step=1, limit=4
    $region2: #{tpu_custom_call.1} parent=1 // loop_pre_header
      _
    $region3: #{tpu_custom_call.1} parent=1 // loop_header
      %s15 = sphi 0, %s19
      %p16 = scmp.ge.s32.totalorder %s15, 4
      %s22 = sphi 0, %s34
      %s23 = sphi 0, %s30
      %s24 = sphi 0, %s22
      %s25 = sphi 0, %s23
      %s26 = sphi 0, %s24
      %s27 = sphi 0, %s25
      %s35 = sphi 0, %s35
      %s37 = sphi 0, %s35
      %s38 = sphi 0, %s37
      %s52 = sphi 0, %s38
      %s60 = sphi 0, %s62
      %s63 = sphi 0, %s60
      %s64 = sphi 0, %s63
      %s80 = sphi 0, %s64
      %s88 = sphi 0, %s90
      %s91 = sphi 0, %s88
      %s92 = sphi 0, %s91
      %s108 = sphi 0, %s92
    $region4: #{tpu_custom_call.1} parent=1 // loop_header_branch
      %18 = sbr.rel (%p16) target = $region8
    $region5: #{tpu_custom_call.1} parent=1 // loop_body
      %s20 = ssub.s32 %s15, 1
      %s21 = ssub.s32 %s15, 2
      %s28 = sadd.s32 1, %s23
      %p29 = scmp.ge.s32.totalorder %s28, 2
      %s30 = scalar_select %p29, 0, %s28
      %s31 = sadd.s32 1, %s22
      %s32 = scalar_select %p29, %s31, %s22
      %p33 = scmp.ge.s32.totalorder %s32, 1
      %s34 = scalar_select %p33, 0, %s32
      %s36 = sadd.s32 %s35, 1
      %p39 = scmp.eq.s32.totalorder %s15, 1
      %p40 = scmp.ne.s32.totalorder %s35, %s37
      %p41 = scmp.eq.s32.totalorder %s15, 0
      %p42 = por %p40, %p41
      %p43 = scmp.ne.s32.totalorder %s35, %s37
      %p44 = scmp.eq.s32.totalorder %s20, 1
      %p45 = por %p43, %p44
      %p46 = scmp.ne.s32.totalorder %s37, %s38
      %p47 = scmp.eq.s32.totalorder %s20, 0
      %p48 = por %p46, %p47
      %p49 = scmp.ne.s32.totalorder %s37, %s38
      %p50 = scmp.eq.s32.totalorder %s21, 1
      %p51 = por %p49, %p50
      %p53 = scmp.ne.s32.totalorder %s38, %s52
      %p54 = scmp.eq.s32.totalorder %s21, 0
      %p55 = por %p53, %p54
      %s56 = ssub.s32 %s22, %s34
      %s57 = ssub.s32 %s23, %s30
      %s58 = sor.u32 %s56, %s57
      %p59 = scmp.eq.s32.totalorder %s58, 0
      %s61 = sadd.s32 %s60, 1
      %s62 = scalar_select %p59, %s60, %s61
      %p65 = pneg %p59
      %p66 = scmp.eq.s32.totalorder %s15, 1
      %p67 = por %p65, %p66
      %p68 = scmp.ne.s32.totalorder %s60, %s63
      %p69 = scmp.eq.s32.totalorder %s15, 0
      %p70 = por %p68, %p69
      %p71 = scmp.ne.s32.totalorder %s60, %s63
      %p72 = scmp.eq.s32.totalorder %s20, 1
      %p73 = por %p71, %p72
      %p74 = scmp.ne.s32.totalorder %s63, %s64
      %p75 = scmp.eq.s32.totalorder %s20, 0
      %p76 = por %p74, %p75
      %p77 = scmp.ne.s32.totalorder %s63, %s64
      %p78 = scmp.eq.s32.totalorder %s21, 1
      %p79 = por %p77, %p78
      %p81 = scmp.ne.s32.totalorder %s64, %s80
      %p82 = scmp.eq.s32.totalorder %s21, 0
      %p83 = por %p81, %p82
      %s84 = ssub.s32 %s22, %s34
      %s85 = ssub.s32 %s23, %s30
      %s86 = sor.u32 %s84, %s85
      %p87 = scmp.eq.s32.totalorder %s86, 0
      %s89 = sadd.s32 %s88, 1
      %s90 = scalar_select %p87, %s88, %s89
      %p93 = pneg %p87
      %p94 = scmp.eq.s32.totalorder %s15, 1
      %p95 = por %p93, %p94
      %p96 = scmp.ne.s32.totalorder %s88, %s91
      %p97 = scmp.eq.s32.totalorder %s15, 0
      %p98 = por %p96, %p97
      %p99 = scmp.ne.s32.totalorder %s88, %s91
      %p100 = scmp.eq.s32.totalorder %s20, 1
      %p101 = por %p99, %p100
      %p102 = scmp.ne.s32.totalorder %s91, %s92
      %p103 = scmp.eq.s32.totalorder %s20, 0
      %p104 = por %p102, %p103
      %p105 = scmp.ne.s32.totalorder %s91, %s92
      %p106 = scmp.eq.s32.totalorder %s21, 1
      %p107 = por %p105, %p106
      %p109 = scmp.ne.s32.totalorder %s92, %s108
      %p110 = scmp.eq.s32.totalorder %s21, 0
      %p111 = por %p109, %p110
      %p112 = scmp.le.s32.totalorder 1, %s15
      %p113 = scmp.lt.s32.totalorder %s15, 3
      %p114 = pnand %p112, %p113
      %p115 = pneg %p114
      // Predicated region
      $region9: #{tpu_custom_call.1} parent=5 // pred_check
        _
      $region10: #{tpu_custom_call.1} parent=5 // pred_check_branch
        %117 = sbr.rel (%p114) target = $region12
      $region11: #{tpu_custom_call.1} parent=5 // pred_region
        %s118 = ssub.s32 %s15, 1
        // Predicated region
        $region13: #{tpu_custom_call.1} parent=11 // pred_check
          %p119 = pneg %p48
        $region14: #{tpu_custom_call.1} parent=11 // pred_check_branch
          %121 = sbr.rel (%p119) target = $region16
        $region15: #{tpu_custom_call.1} parent=11 // pred_region
          %s123 = ssub.s32 3072, 3072
          %124 = vsyncadd [#allocation3], %s123
          %s125 = sshll.u32 [#allocation2], 4
          %s126 = int_to_ptr.vmem [resolvable:$true] %s125
          %131 = dma.hbm_to_vmem [thread:$0]  %s0, 3072, %s126, [#allocation3], 384, 384, 24
        $region16: #{tpu_custom_call.1} parent=11 // pred_fallthru
          _
      $region12: #{tpu_custom_call.1} parent=5 // pred_fallthru
        _
      %p132 = scmp.lt.s32.totalorder %s15, 2
      // Predicated region
      $region17: #{tpu_custom_call.1} parent=5 // pred_check
        %p133 = pneg %p132
      $region18: #{tpu_custom_call.1} parent=5 // pred_check_branch
        %135 = sbr.rel (%p133) target = $region20
      $region19: #{tpu_custom_call.1} parent=5 // pred_region
        // Predicated region
        $region21: #{tpu_custom_call.1} parent=19 // pred_check
          %p136 = pneg %p70
        $region22: #{tpu_custom_call.1} parent=19 // pred_check_branch
          %138 = sbr.rel (%p136) target = $region24
        $region23: #{tpu_custom_call.1} parent=19 // pred_region
          %s139 = sand.u32 %s60, 1
          %s140 = scalar_lea.sflag [#allocation6], %s139
          %s141 = sand.u32 %s60, 1
          %s142 = smul.addr %s141, 864
          %s143 = scalar_lea.vmem [#allocation5], %s142
          %s144 = smul.u32 3, %s23
          %s145 = ssub.s32 5, %s144
          %p146 = scmp.lt.s32.totalorder %s145, 3
          %s147 = scalar_select %p146, %s145, 3
          %s148 = smul.u32 4608, %s147
          %s150 = ssub.s32 13824, %s148
          %151 = vsyncadd %s140, %s150
          %p152 = scmp.ne.s32.totalorder 0, %s148
          %s153 = smul.addr %s22, 180
          %s154 = sadd.s32 %s144, %s153
          %s155 = smul.addr %s154, 128
          %s156 = scalar_lea.hbm %s1, %s155
          %s157 = smul.u32 %s147, 8
          %s158 = smul.u32 %s157, 36
          %s159 = sshll.u32 %s143, 4
          %s160 = int_to_ptr.vmem [resolvable:$true] %s159
          %s161 = sshll.u32 %s158, 4
          %165 = dma.hbm_to_vmem [thread:$0]  (%p152), %s156, %s161, %s160, %s140, 640, 384, %s157
        $region24: #{tpu_custom_call.1} parent=19 // pred_fallthru
          _
      $region20: #{tpu_custom_call.1} parent=5 // pred_fallthru
        _
      %p166 = scmp.le.s32.totalorder 1, %s15
      %p167 = scmp.lt.s32.totalorder %s15, 3
      %p168 = pnand %p166, %p167
      %p169 = pneg %p168
      // Predicated region
      $region25: #{tpu_custom_call.1} parent=5 // pred_check
        _
      $region26: #{tpu_custom_call.1} parent=5 // pred_check_branch
        %171 = sbr.rel (%p168) target = $region28
      $region27: #{tpu_custom_call.1} parent=5 // pred_region
        %s172 = ssub.s32 %s15, 1
        // Predicated region
        $region29: #{tpu_custom_call.1} parent=27 // pred_check
          %p173 = pneg %p48
        $region30: #{tpu_custom_call.1} parent=27 // pred_check_branch
          %175 = sbr.rel (%p173) target = $region32
        $region31: #{tpu_custom_call.1} parent=27 // pred_region
          %176 = dma.done [#allocation3], 3072
        $region32: #{tpu_custom_call.1} parent=27 // pred_fallthru
          _
        %s177 = sand.u32 %s63, 1
        %s178 = scalar_lea.sflag [#allocation6], %s177
        %s179 = sand.u32 %s63, 1
        %s180 = smul.addr %s179, 864
        %s181 = scalar_lea.vmem [#allocation5], %s180
        // Predicated region
        $region33: #{tpu_custom_call.1} parent=27 // pred_check
          %p182 = pneg %p76
        $region34: #{tpu_custom_call.1} parent=27 // pred_check_branch
          %184 = sbr.rel (%p182) target = $region36
        $region35: #{tpu_custom_call.1} parent=27 // pred_region
          %185 = dma.done %s178, 13824
        $region36: #{tpu_custom_call.1} parent=27 // pred_fallthru
          _
        %p186 = pneg %p48
        %p187 = pneg %p45
        %s188 = sand.u32 %s63, 1
        %s189 = scalar_lea.sflag [#allocation6], %s188
        %s190 = sand.u32 %s63, 1
        %s191 = smul.addr %s190, 864
        %s192 = scalar_lea.vmem [#allocation5], %s191
        %p193 = pneg %p76
        %p194 = pneg %p73
        %p195 = pneg %p104
        %p196 = pneg %p101
        %s197 = sand.u32 %s91, 1
        %s198 = scalar_lea.sflag [#allocation4], %s197
        %s199 = sand.u32 %s91, 1
        %s200 = smul.addr %s199, 192
        %s201 = scalar_lea.vmem [#allocation7], %s200
        %s202 = smul.u32 3, %s25
        %s203 = ssub.s32 5, %s202
        %p204 = scmp.lt.s32.totalorder %s203, 3
        %s205 = scalar_select %p204, %s203, 3
        %s206 = smul.u32 4608, %s205
        %s207 = smul.u32 3, %s25
        %s208 = ssub.s32 5, %s207
        %p209 = scmp.lt.s32.totalorder %s208, 3
        %s210 = scalar_select %p209, %s208, 3
        %s211 = smul.u32 1024, %s210
        %v213 = vld [vmem:[#allocation2] sm:$0xff]
        %v214 = vld [vmem:[#allocation2 + $0x8] sm:$0xff]
        %v215 = vld [vmem:[#allocation2 + $0x10] sm:$0xff]
        %v216 = vld [vmem:[#allocation2 + $0x18] sm:$0xff]
        %v217 = vld [vmem:[#allocation2 + $0x20] sm:$0xff]
        %v218 = vld [vmem:[#allocation2 + $0x28] sm:$0xff]
        %v219 = vld [vmem:[#allocation2 + $0x30] sm:$0xff]
        %v220 = vld [vmem:[#allocation2 + $0x38] sm:$0xff]
        %v221 = vld [vmem:[#allocation2 + $0x40] sm:$0xff]
        %v222 = vld [vmem:[#allocation2 + $0x48] sm:$0xff]
        %v223 = vld [vmem:[#allocation2 + $0x50] sm:$0xff]
        %v224 = vld [vmem:[#allocation2 + $0x58] sm:$0xff]
        %v225 = vld [vmem:[#allocation2 + $0x60] sm:$0xff]
        %v226 = vld [vmem:[#allocation2 + $0x68] sm:$0xff]
        %v227 = vld [vmem:[#allocation2 + $0x70] sm:$0xff]
        %v228 = vld [vmem:[#allocation2 + $0x78] sm:$0xff]
        %v229 = vld [vmem:[#allocation2 + $0x80] sm:$0xff]
        %v230 = vld [vmem:[#allocation2 + $0x88] sm:$0xff]
        %v231 = vld [vmem:[#allocation2 + $0x90] sm:$0xff]
        %v232 = vld [vmem:[#allocation2 + $0x98] sm:$0xff]
        %v233 = vld [vmem:[#allocation2 + $0xa0] sm:$0xff]
        %v234 = vld [vmem:[#allocation2 + $0xa8] sm:$0xff]
        %v235 = vld [vmem:[#allocation2 + $0xb0] sm:$0xff]
        %v236 = vld [vmem:[#allocation2 + $0xb8] sm:$0xff]
        %v237 = vpack.c.bf16 %v216, %v213
        %v238 = vpack.c.bf16 %v217, %v214
        %v239 = vpack.c.bf16 %v218, %v215
        %v240 = vpack.c.bf16 %v222, %v219
        %v241 = vpack.c.bf16 %v223, %v220
        %v242 = vpack.c.bf16 %v224, %v221
        %v243 = vpack.c.bf16 %v228, %v225
        %v244 = vpack.c.bf16 %v229, %v226
        %v245 = vpack.c.bf16 %v230, %v227
        %v246 = vpack.c.bf16 %v234, %v231
        %v247 = vpack.c.bf16 %v235, %v232
        %v248 = vpack.c.bf16 %v236, %v233
        %v249 = vld [vmem:[%s181] sm:$0xff]
        %v250 = vld [vmem:[%s181 + $0x8] sm:$0xff]
        %v251 = vld [vmem:[%s181 + $0x10] sm:$0xff]
        %v252 = vld [vmem:[%s181 + $0x18] sm:$0xff]
        %v253 = vld [vmem:[%s181 + $0x20] sm:$0xff]
        %v254 = vld [vmem:[%s181 + $0x28] sm:$0xff]
        %v255 = vld [vmem:[%s181 + $0x30] sm:$0xff]
        %v256 = vld [vmem:[%s181 + $0x38] sm:$0xff]
        %v257 = vld [vmem:[%s181 + $0x40] sm:$0xff]
        %v258 = vld [vmem:[%s181 + $0x48] sm:$0xff]
        %v259 = vld [vmem:[%s181 + $0x50] sm:$0xff]
        %v260 = vld [vmem:[%s181 + $0x58] sm:$0xff]
        %v261 = vld [vmem:[%s181 + $0x60] sm:$0xff]
        %v262 = vld [vmem:[%s181 + $0x68] sm:$0xff]
        %v263 = vld [vmem:[%s181 + $0x70] sm:$0xff]
        %v264 = vld [vmem:[%s181 + $0x78] sm:$0xff]
        %v265 = vld [vmem:[%s181 + $0x80] sm:$0xff]
        %v266 = vld [vmem:[%s181 + $0x88] sm:$0xff]
        %v267 = vld [vmem:[%s181 + $0x90] sm:$0xff]
        %v268 = vld [vmem:[%s181 + $0x98] sm:$0xff]
        %v269 = vld [vmem:[%s181 + $0xa0] sm:$0xff]
        %v270 = vld [vmem:[%s181 + $0xa8] sm:$0xff]
        %v271 = vld [vmem:[%s181 + $0xb0] sm:$0xff]
        %v272 = vld [vmem:[%s181 + $0xb8] sm:$0xff]
        %v273 = vld [vmem:[%s181 + $0xc0] sm:$0xff]
        %v274 = vld [vmem:[%s181 + $0xc8] sm:$0xff]
        %v275 = vld [vmem:[%s181 + $0xd0] sm:$0xff]
        %v276 = vld [vmem:[%s181 + $0xd8] sm:$0xff]
        %v277 = vld [vmem:[%s181 + $0xe0] sm:$0xff]
        %v278 = vld [vmem:[%s181 + $0xe8] sm:$0xff]
        %v279 = vld [vmem:[%s181 + $0xf0] sm:$0xff]
        %v280 = vld [vmem:[%s181 + $0xf8] sm:$0xff]
        %v281 = vld [vmem:[%s181 + $0x100] sm:$0xff]
        %v282 = vld [vmem:[%s181 + $0x108] sm:$0xff]
        %v283 = vld [vmem:[%s181 + $0x110] sm:$0xff]
        %v284 = vld [vmem:[%s181 + $0x118] sm:$0xff]
        %v285 = vld [vmem:[%s181 + $0x120] sm:$0xff]
        %v286 = vld [vmem:[%s181 + $0x128] sm:$0xff]
        %v287 = vld [vmem:[%s181 + $0x130] sm:$0xff]
        %v288 = vld [vmem:[%s181 + $0x138] sm:$0xff]
        %v289 = vld [vmem:[%s181 + $0x140] sm:$0xff]
        %v290 = vld [vmem:[%s181 + $0x148] sm:$0xff]
        %v291 = vld [vmem:[%s181 + $0x150] sm:$0xff]
        %v292 = vld [vmem:[%s181 + $0x158] sm:$0xff]
        %v293 = vld [vmem:[%s181 + $0x160] sm:$0xff]
        %v294 = vld [vmem:[%s181 + $0x168] sm:$0xff]
        %v295 = vld [vmem:[%s181 + $0x170] sm:$0xff]
        %v296 = vld [vmem:[%s181 + $0x178] sm:$0xff]
        %v297 = vld [vmem:[%s181 + $0x180] sm:$0xff]
        %v298 = vld [vmem:[%s181 + $0x188] sm:$0xff]
        %v299 = vld [vmem:[%s181 + $0x190] sm:$0xff]
        %v300 = vld [vmem:[%s181 + $0x198] sm:$0xff]
        %v301 = vld [vmem:[%s181 + $0x1a0] sm:$0xff]
        %v302 = vld [vmem:[%s181 + $0x1a8] sm:$0xff]
        %v303 = vld [vmem:[%s181 + $0x1b0] sm:$0xff]
        %v304 = vld [vmem:[%s181 + $0x1b8] sm:$0xff]
        %v305 = vld [vmem:[%s181 + $0x1c0] sm:$0xff]
        %v306 = vld [vmem:[%s181 + $0x1c8] sm:$0xff]
        %v307 = vld [vmem:[%s181 + $0x1d0] sm:$0xff]
        %v308 = vld [vmem:[%s181 + $0x1d8] sm:$0xff]
        %v309 = vld [vmem:[%s181 + $0x1e0] sm:$0xff]
        %v310 = vld [vmem:[%s181 + $0x1e8] sm:$0xff]
        %v311 = vld [vmem:[%s181 + $0x1f0] sm:$0xff]
        %v312 = vld [vmem:[%s181 + $0x1f8] sm:$0xff]
        %v313 = vld [vmem:[%s181 + $0x200] sm:$0xff]
        %v314 = vld [vmem:[%s181 + $0x208] sm:$0xff]
        %v315 = vld [vmem:[%s181 + $0x210] sm:$0xff]
        %v316 = vld [vmem:[%s181 + $0x218] sm:$0xff]
        %v317 = vld [vmem:[%s181 + $0x220] sm:$0xff]
        %v318 = vld [vmem:[%s181 + $0x228] sm:$0xff]
        %v319 = vld [vmem:[%s181 + $0x230] sm:$0xff]
        %v320 = vld [vmem:[%s181 + $0x238] sm:$0xff]
        %v321 = vld [vmem:[%s181 + $0x240] sm:$0xff]
        %v322 = vld [vmem:[%s181 + $0x248] sm:$0xff]
        %v323 = vld [vmem:[%s181 + $0x250] sm:$0xff]
        %v324 = vld [vmem:[%s181 + $0x258] sm:$0xff]
        %v325 = vld [vmem:[%s181 + $0x260] sm:$0xff]
        %v326 = vld [vmem:[%s181 + $0x268] sm:$0xff]
        %v327 = vld [vmem:[%s181 + $0x270] sm:$0xff]
        %v328 = vld [vmem:[%s181 + $0x278] sm:$0xff]
        %v329 = vld [vmem:[%s181 + $0x280] sm:$0xff]
        %v330 = vld [vmem:[%s181 + $0x288] sm:$0xff]
        %v331 = vld [vmem:[%s181 + $0x290] sm:$0xff]
        %v332 = vld [vmem:[%s181 + $0x298] sm:$0xff]
        %v333 = vld [vmem:[%s181 + $0x2a0] sm:$0xff]
        %v334 = vld [vmem:[%s181 + $0x2a8] sm:$0xff]
        %v335 = vld [vmem:[%s181 + $0x2b0] sm:$0xff]
        %v336 = vld [vmem:[%s181 + $0x2b8] sm:$0xff]
        %v337 = vld [vmem:[%s181 + $0x2c0] sm:$0xff]
        %v338 = vld [vmem:[%s181 + $0x2c8] sm:$0xff]
        %v339 = vld [vmem:[%s181 + $0x2d0] sm:$0xff]
        %v340 = vld [vmem:[%s181 + $0x2d8] sm:$0xff]
        %v341 = vld [vmem:[%s181 + $0x2e0] sm:$0xff]
        %v342 = vld [vmem:[%s181 + $0x2e8] sm:$0xff]
        %v343 = vld [vmem:[%s181 + $0x2f0] sm:$0xff]
        %v344 = vld [vmem:[%s181 + $0x2f8] sm:$0xff]
        %v345 = vld [vmem:[%s181 + $0x300] sm:$0xff]
        %v346 = vld [vmem:[%s181 + $0x308] sm:$0xff]
        %v347 = vld [vmem:[%s181 + $0x310] sm:$0xff]
        %v348 = vld [vmem:[%s181 + $0x318] sm:$0xff]
        %v349 = vld [vmem:[%s181 + $0x320] sm:$0xff]
        %v350 = vld [vmem:[%s181 + $0x328] sm:$0xff]
        %v351 = vld [vmem:[%s181 + $0x330] sm:$0xff]
        %v352 = vld [vmem:[%s181 + $0x338] sm:$0xff]
        %v353 = vld [vmem:[%s181 + $0x340] sm:$0xff]
        %v354 = vld [vmem:[%s181 + $0x348] sm:$0xff]
        %v355 = vld [vmem:[%s181 + $0x350] sm:$0xff]
        %v356 = vld [vmem:[%s181 + $0x358] sm:$0xff]
        %v357 = vpack.c.bf16 %v252, %v249
        %v358 = vpack.c.bf16 %v253, %v250
        %v359 = vpack.c.bf16 %v254, %v251
        %v360 = vpack.c.bf16 %v258, %v255
        %v361 = vpack.c.bf16 %v259, %v256
        %v362 = vpack.c.bf16 %v260, %v257
        %v363 = vpack.c.bf16 %v264, %v261
        %v364 = vpack.c.bf16 %v265, %v262
        %v365 = vpack.c.bf16 %v266, %v263
        %v366 = vpack.c.bf16 %v270, %v267
        %v367 = vpack.c.bf16 %v271, %v268
        %v368 = vpack.c.bf16 %v272, %v269
        %v369 = vpack.c.bf16 %v276, %v273
        %v370 = vpack.c.bf16 %v277, %v274
        %v371 = vpack.c.bf16 %v278, %v275
        %v372 = vpack.c.bf16 %v282, %v279
        %v373 = vpack.c.bf16 %v283, %v280
        %v374 = vpack.c.bf16 %v284, %v281
        %v375 = vpack.c.bf16 %v288, %v285
        %v376 = vpack.c.bf16 %v289, %v286
        %v377 = vpack.c.bf16 %v290, %v287
        %v378 = vpack.c.bf16 %v294, %v291
        %v379 = vpack.c.bf16 %v295, %v292
        %v380 = vpack.c.bf16 %v296, %v293
        %v381 = vpack.c.bf16 %v300, %v297
        %v382 = vpack.c.bf16 %v301, %v298
        %v383 = vpack.c.bf16 %v302, %v299
        %v384 = vpack.c.bf16 %v306, %v303
        %v385 = vpack.c.bf16 %v307, %v304
        %v386 = vpack.c.bf16 %v308, %v305
        %v387 = vpack.c.bf16 %v312, %v309
        %v388 = vpack.c.bf16 %v313, %v310
        %v389 = vpack.c.bf16 %v314, %v311
        %v390 = vpack.c.bf16 %v318, %v315
        %v391 = vpack.c.bf16 %v319, %v316
        %v392 = vpack.c.bf16 %v320, %v317
        %v393 = vpack.c.bf16 %v324, %v321
        %v394 = vpack.c.bf16 %v325, %v322
        %v395 = vpack.c.bf16 %v326, %v323
        %v396 = vpack.c.bf16 %v330, %v327
        %v397 = vpack.c.bf16 %v331, %v328
        %v398 = vpack.c.bf16 %v332, %v329
        %v399 = vpack.c.bf16 %v336, %v333
        %v400 = vpack.c.bf16 %v337, %v334
        %v401 = vpack.c.bf16 %v338, %v335
        %v402 = vpack.c.bf16 %v342, %v339
        %v403 = vpack.c.bf16 %v343, %v340
        %v404 = vpack.c.bf16 %v344, %v341
        %v405 = vpack.c.bf16 %v348, %v345
        %v406 = vpack.c.bf16 %v349, %v346
        %v407 = vpack.c.bf16 %v350, %v347
        %v408 = vpack.c.bf16 %v354, %v351
        %v409 = vpack.c.bf16 %v355, %v352
        %v410 = vpack.c.bf16 %v356, %v353
        %vm411 = vcmask 261120
        %v413 = vsel %vm411, %v239, 0
        %v416 = vsel %vm411, %v242, 0
        %v419 = vsel %vm411, %v245, 0
        %v422 = vsel %vm411, %v248, 0
        %424 = vmatprep.subr.bf16.mxu0 %v358
        %425 = vmatpush1.bf16.msra.mxu0 %v357
        %426 = vmatprep.subr.bf16.mxu0 %v361
        %427 = vmatpush1.bf16.msra.mxu0 %v360
        %428 = vmatprep.subr.bf16.mxu0 %v364
        %429 = vmatpush1.bf16.msra.mxu0 %v363
        %430 = vmatprep.subr.bf16.mxu0 %v367
        %431 = vmatpush1.bf16.msra.mxu0 %v366
        %432 = vmatprep.subr.bf16.mxu0 %v370
        %433 = vmatpush1.bf16.msra.mxu0 %v369
        %434 = vmatprep.subr.bf16.mxu0 %v373
        %435 = vmatpush1.bf16.msra.mxu0 %v372
        %436 = vmatprep.subr.bf16.mxu0 %v376
        %437 = vmatpush1.bf16.msra.mxu0 %v375
        %438 = vmatprep.subr.bf16.mxu0 %v379
        %439 = vmatpush1.bf16.msra.mxu0 %v378
        %440 = vmatprep.subr.bf16.mxu0 %v382
        %441 = vmatpush1.bf16.msra.mxu0 %v381
        %442 = vmatprep.subr.bf16.mxu0 %v385
        %443 = vmatpush1.bf16.msra.mxu0 %v384
        %444 = vmatprep.subr.bf16.mxu0 %v388
        %445 = vmatpush1.bf16.msra.mxu0 %v387
        %446 = vmatprep.subr.bf16.mxu0 %v391
        %447 = vmatpush1.bf16.msra.mxu0 %v390
        %448 = vmatprep.subr.bf16.mxu0 %v394
        %449 = vmatpush1.bf16.msra.mxu0 %v393
        %450 = vmatprep.subr.bf16.mxu0 %v397
        %451 = vmatpush1.bf16.msra.mxu0 %v396
        %452 = vmatprep.subr.bf16.mxu0 %v400
        %453 = vmatpush1.bf16.msra.mxu0 %v399
        %454 = vmatprep.subr.bf16.mxu0 %v403
        %455 = vmatpush1.bf16.msra.mxu0 %v402
        %456 = vmatprep.mubr.bf16.mxu0 %v238
        %457 = vmatmul.mubr.bf16.gmra.mrb[0].mxu0 %v237
        %v458 = vpop.f32.mrb[0].mxu0
        %v459 = vadd.f32 0.0, %v458
        %v460 = vpop.f32.mrb[0].mxu0
        %v461 = vadd.f32 0.0, %v460
        %v462 = vpop.f32.mrb[0].mxu0
        %v463 = vadd.f32 0.0, %v462
        %v464 = vpop.f32.mrb[0].mxu0
        %v465 = vadd.f32 0.0, %v464
        %466 = vmatprep.mubr.bf16.mxu0 %v241
        %467 = vmatmul.mubr.bf16.gmra.mrb[0].mxu0 %v240
        %v468 = vpop.f32.mrb[0].mxu0
        %v469 = vadd.f32 0.0, %v468
        %v470 = vpop.f32.mrb[0].mxu0
        %v471 = vadd.f32 0.0, %v470
        %v472 = vpop.f32.mrb[0].mxu0
        %v473 = vadd.f32 0.0, %v472
        %v474 = vpop.f32.mrb[0].mxu0
        %v475 = vadd.f32 0.0, %v474
        %476 = vmatprep.mubr.bf16.mxu0 %v244
        %477 = vmatmul.mubr.bf16.gmra.mrb[0].mxu0 %v243
        %v478 = vpop.f32.mrb[0].mxu0
        %v479 = vadd.f32 0.0, %v478
        %v480 = vpop.f32.mrb[0].mxu0
        %v481 = vadd.f32 0.0, %v480
        %v482 = vpop.f32.mrb[0].mxu0
        %v483 = vadd.f32 0.0, %v482
        %v484 = vpop.f32.mrb[0].mxu0
        %v485 = vadd.f32 0.0, %v484
        %486 = vmatprep.mubr.bf16.mxu0 %v247
        %487 = vmatmul.mubr.bf16.gmra.mrb[0].mxu0 %v246
        %v488 = vpop.f32.mrb[0].mxu0
        %v489 = vadd.f32 0.0, %v488
        %v490 = vpop.f32.mrb[0].mxu0
        %v491 = vadd.f32 0.0, %v490
        %v492 = vpop.f32.mrb[0].mxu0
        %v493 = vadd.f32 0.0, %v492
        %v494 = vpop.f32.mrb[0].mxu0
        %v495 = vadd.f32 0.0, %v494
        %496 = vdwg.mxu0
        %497 = vmatprep.subr.bf16.mxu0 %v406
        %498 = vmatpush1.bf16.msra.mxu0 %v405
        %499 = vmatprep.subr.bf16.mxu0 %v409
        %500 = vmatpush1.bf16.msra.mxu0 %v408
        %501 = vmatprep.subr.bf16.mxu0 0
        %502 = vmatpush1.bf16.msra.mxu0 0
        %503 = vmatprep.subr.bf16.mxu0 0
        %504 = vmatpush1.bf16.msra.mxu0 0
        %505 = vmatprep.subr.bf16.mxu0 0
        %506 = vmatpush1.bf16.msra.mxu0 0
        %507 = vmatprep.subr.bf16.mxu0 0
        %508 = vmatpush1.bf16.msra.mxu0 0
        %509 = vmatprep.subr.bf16.mxu0 0
        %510 = vmatpush1.bf16.msra.mxu0 0
        %511 = vmatprep.subr.bf16.mxu0 0
        %512 = vmatpush1.bf16.msra.mxu0 0
        %513 = vmatprep.subr.bf16.mxu0 0
        %514 = vmatpush1.bf16.msra.mxu0 0
        %515 = vmatprep.subr.bf16.mxu0 0
        %516 = vmatpush1.bf16.msra.mxu0 0
        %517 = vmatprep.subr.bf16.mxu0 0
        %518 = vmatpush1.bf16.msra.mxu0 0
        %519 = vmatprep.subr.bf16.mxu0 0
        %520 = vmatpush1.bf16.msra.mxu0 0
        %521 = vmatprep.subr.bf16.mxu0 0
        %522 = vmatpush1.bf16.msra.mxu0 0
        %523 = vmatprep.subr.bf16.mxu0 0
        %524 = vmatpush1.bf16.msra.mxu0 0
        %525 = vmatprep.subr.bf16.mxu0 0
        %526 = vmatpush1.bf16.msra.mxu0 0
        %527 = vmatprep.subr.bf16.mxu0 0
        %528 = vmatpush1.bf16.msra.mxu0 0
        %529 = vmatprep.mubr.bf16.mxu0 0
        %530 = vmatmul.mubr.bf16.gmra.mrb[0].mxu0 %v413
        %v531 = vpop.f32.mrb[0].mxu0
        %v532 = vadd.f32 %v459, %v531
        %v533 = vpop.f32.mrb[0].mxu0
        %v534 = vadd.f32 %v461, %v533
        %v535 = vpop.f32.mrb[0].mxu0
        %v536 = vadd.f32 %v463, %v535
        %v537 = vpop.f32.mrb[0].mxu0
        %v538 = vadd.f32 %v465, %v537
        %539 = vmatprep.mubr.bf16.mxu0 0
        %540 = vmatmul.mubr.bf16.gmra.mrb[0].mxu0 %v416
        %v541 = vpop.f32.mrb[0].mxu0
        %v542 = vadd.f32 %v469, %v541
        %v543 = vpop.f32.mrb[0].mxu0
        %v544 = vadd.f32 %v471, %v543
        %v545 = vpop.f32.mrb[0].mxu0
        %v546 = vadd.f32 %v473, %v545
        %v547 = vpop.f32.mrb[0].mxu0
        %v548 = vadd.f32 %v475, %v547
        %549 = vmatprep.mubr.bf16.mxu0 0
        %550 = vmatmul.mubr.bf16.gmra.mrb[0].mxu0 %v419
        %v551 = vpop.f32.mrb[0].mxu0
        %v552 = vadd.f32 %v479, %v551
        %v553 = vpop.f32.mrb[0].mxu0
        %v554 = vadd.f32 %v481, %v553
        %v555 = vpop.f32.mrb[0].mxu0
        %v556 = vadd.f32 %v483, %v555
        %v557 = vpop.f32.mrb[0].mxu0
        %v558 = vadd.f32 %v485, %v557
        %559 = vmatprep.mubr.bf16.mxu0 0
        %560 = vmatmul.mubr.bf16.gmra.mrb[0].mxu0 %v422
        %v561 = vpop.f32.mrb[0].mxu0
        %v562 = vadd.f32 %v489, %v561
        %v563 = vpop.f32.mrb[0].mxu0
        %v564 = vadd.f32 %v491, %v563
        %v565 = vpop.f32.mrb[0].mxu0
        %v566 = vadd.f32 %v493, %v565
        %v567 = vpop.f32.mrb[0].mxu0
        %v568 = vadd.f32 %v495, %v567
        %569 = vdwg.mxu0
        %570 = vmatprep.subr.bf16.mxu0 0
        %571 = vmatpush1.bf16.msra.mxu0 %v359
        %572 = vmatprep.subr.bf16.mxu0 0
        %573 = vmatpush1.bf16.msra.mxu0 %v362
        %574 = vmatprep.subr.bf16.mxu0 0
        %575 = vmatpush1.bf16.msra.mxu0 %v365
        %576 = vmatprep.subr.bf16.mxu0 0
        %577 = vmatpush1.bf16.msra.mxu0 %v368
        %578 = vmatprep.subr.bf16.mxu0 0
        %579 = vmatpush1.bf16.msra.mxu0 %v371
        %580 = vmatprep.subr.bf16.mxu0 0
        %581 = vmatpush1.bf16.msra.mxu0 %v374
        %582 = vmatprep.subr.bf16.mxu0 0
        %583 = vmatpush1.bf16.msra.mxu0 %v377
        %584 = vmatprep.subr.bf16.mxu0 0
        %585 = vmatpush1.bf16.msra.mxu0 %v380
        %586 = vmatprep.subr.bf16.mxu0 0
        %587 = vmatpush1.bf16.msra.mxu0 %v383
        %588 = vmatprep.subr.bf16.mxu0 0
        %589 = vmatpush1.bf16.msra.mxu0 %v386
        %590 = vmatprep.subr.bf16.mxu0 0
        %591 = vmatpush1.bf16.msra.mxu0 %v389
        %592 = vmatprep.subr.bf16.mxu0 0
        %593 = vmatpush1.bf16.msra.mxu0 %v392
        %594 = vmatprep.subr.bf16.mxu0 0
        %595 = vmatpush1.bf16.msra.mxu0 %v395
        %596 = vmatprep.subr.bf16.mxu0 0
        %597 = vmatpush1.bf16.msra.mxu0 %v398
        %598 = vmatprep.subr.bf16.mxu0 0
        %599 = vmatpush1.bf16.msra.mxu0 %v401
        %600 = vmatprep.subr.bf16.mxu0 0
        %601 = vmatpush1.bf16.msra.mxu0 %v404
        %602 = vmatprep.mubr.bf16.mxu0 %v238
        %603 = vmatmul.mubr.bf16.gmra.mrb[0].mxu0 %v237
        %v604 = vpop.f32.mrb[0].mxu0
        %v605 = vadd.f32 0.0, %v604
        %v606 = vpop.f32.mrb[0].mxu0
        %v607 = vpop.f32.mrb[0].mxu0
        %v608 = vadd.f32 0.0, %v607
        %v609 = vpop.f32.mrb[0].mxu0
        %610 = vmatprep.mubr.bf16.mxu0 %v241
        %611 = vmatmul.mubr.bf16.gmra.mrb[0].mxu0 %v240
        %v612 = vpop.f32.mrb[0].mxu0
        %v613 = vadd.f32 0.0, %v612
        %v614 = vpop.f32.mrb[0].mxu0
        %v615 = vpop.f32.mrb[0].mxu0
        %v616 = vadd.f32 0.0, %v615
        %v617 = vpop.f32.mrb[0].mxu0
        %618 = vmatprep.mubr.bf16.mxu0 %v244
        %619 = vmatmul.mubr.bf16.gmra.mrb[0].mxu0 %v243
        %v620 = vpop.f32.mrb[0].mxu0
        %v621 = vadd.f32 0.0, %v620
        %v622 = vpop.f32.mrb[0].mxu0
        %v623 = vpop.f32.mrb[0].mxu0
        %v624 = vadd.f32 0.0, %v623
        %v625 = vpop.f32.mrb[0].mxu0
        %626 = vmatprep.mubr.bf16.mxu0 %v247
        %627 = vmatmul.mubr.bf16.gmra.mrb[0].mxu0 %v246
        %v628 = vpop.f32.mrb[0].mxu0
        %v629 = vadd.f32 0.0, %v628
        %v630 = vpop.f32.mrb[0].mxu0
        %v631 = vpop.f32.mrb[0].mxu0
        %v632 = vadd.f32 0.0, %v631
        %v633 = vpop.f32.mrb[0].mxu0
        %634 = vdwg.mxu0
        %635 = vmatprep.subr.bf16.mxu0 0
        %636 = vmatpush1.bf16.msra.mxu0 %v407
        %637 = vmatprep.subr.bf16.mxu0 0
        %638 = vmatpush1.bf16.msra.mxu0 %v410
        %639 = vmatprep.subr.bf16.mxu0 0
        %640 = vmatpush1.bf16.msra.mxu0 0
        %641 = vmatprep.subr.bf16.mxu0 0
        %642 = vmatpush1.bf16.msra.mxu0 0
        %643 = vmatprep.subr.bf16.mxu0 0
        %644 = vmatpush1.bf16.msra.mxu0 0
        %645 = vmatprep.subr.bf16.mxu0 0
        %646 = vmatpush1.bf16.msra.mxu0 0
        %647 = vmatprep.subr.bf16.mxu0 0
        %648 = vmatpush1.bf16.msra.mxu0 0
        %649 = vmatprep.subr.bf16.mxu0 0
        %650 = vmatpush1.bf16.msra.mxu0 0
        %651 = vmatprep.subr.bf16.mxu0 0
        %652 = vmatpush1.bf16.msra.mxu0 0
        %653 = vmatprep.subr.bf16.mxu0 0
        %654 = vmatpush1.bf16.msra.mxu0 0
        %655 = vmatprep.subr.bf16.mxu0 0
        %656 = vmatpush1.bf16.msra.mxu0 0
        %657 = vmatprep.subr.bf16.mxu0 0
        %658 = vmatpush1.bf16.msra.mxu0 0
        %659 = vmatprep.subr.bf16.mxu0 0
        %660 = vmatpush1.bf16.msra.mxu0 0
        %661 = vmatprep.subr.bf16.mxu0 0
        %662 = vmatpush1.bf16.msra.mxu0 0
        %663 = vmatprep.subr.bf16.mxu0 0
        %664 = vmatpush1.bf16.msra.mxu0 0
        %665 = vmatprep.subr.bf16.mxu0 0
        %666 = vmatpush1.bf16.msra.mxu0 0
        %667 = vmatprep.mubr.bf16.mxu0 0
        %668 = vmatmul.mubr.bf16.gmra.mrb[0].mxu0 %v413
        %v669 = vpop.f32.mrb[0].mxu0
        %v670 = vadd.f32 %v605, %v669
        %v671 = vpop.f32.mrb[0].mxu0
        %v672 = vpop.f32.mrb[0].mxu0
        %v673 = vadd.f32 %v608, %v672
        %v674 = vpop.f32.mrb[0].mxu0
        %675 = vmatprep.mubr.bf16.mxu0 0
        %676 = vmatmul.mubr.bf16.gmra.mrb[0].mxu0 %v416
        %v677 = vpop.f32.mrb[0].mxu0
        %v678 = vadd.f32 %v613, %v677
        %v679 = vpop.f32.mrb[0].mxu0
        %v680 = vpop.f32.mrb[0].mxu0
        %v681 = vadd.f32 %v616, %v680
        %v682 = vpop.f32.mrb[0].mxu0
        %683 = vmatprep.mubr.bf16.mxu0 0
        %684 = vmatmul.mubr.bf16.gmra.mrb[0].mxu0 %v419
        %v685 = vpop.f32.mrb[0].mxu0
        %v686 = vadd.f32 %v621, %v685
        %v687 = vpop.f32.mrb[0].mxu0
        %v688 = vpop.f32.mrb[0].mxu0
        %v689 = vadd.f32 %v624, %v688
        %v690 = vpop.f32.mrb[0].mxu0
        %691 = vmatprep.mubr.bf16.mxu0 0
        %692 = vmatmul.mubr.bf16.gmra.mrb[0].mxu0 %v422
        %v693 = vpop.f32.mrb[0].mxu0
        %v694 = vadd.f32 %v629, %v693
        %v695 = vpop.f32.mrb[0].mxu0
        %v696 = vpop.f32.mrb[0].mxu0
        %v697 = vadd.f32 %v632, %v696
        %v698 = vpop.f32.mrb[0].mxu0
        %699 = vdwg.mxu0
        %700 = vst [vmem:[%s201] sm:$0xff] %v532
        %701 = vst [vmem:[%s201 + $0x8] sm:$0xff] %v534
        %702 = vst [vmem:[%s201 + $0x10] sm:$0xff] %v670
        %703 = vst [vmem:[%s201 + $0x18] sm:$0xff] %v536
        %704 = vst [vmem:[%s201 + $0x20] sm:$0xff] %v538
        %705 = vst [vmem:[%s201 + $0x28] sm:$0xff] %v673
        %706 = vst [vmem:[%s201 + $0x30] sm:$0xff] %v542
        %707 = vst [vmem:[%s201 + $0x38] sm:$0xff] %v544
        %708 = vst [vmem:[%s201 + $0x40] sm:$0xff] %v678
        %709 = vst [vmem:[%s201 + $0x48] sm:$0xff] %v546
        %710 = vst [vmem:[%s201 + $0x50] sm:$0xff] %v548
        %711 = vst [vmem:[%s201 + $0x58] sm:$0xff] %v681
        %712 = vst [vmem:[%s201 + $0x60] sm:$0xff] %v552
        %713 = vst [vmem:[%s201 + $0x68] sm:$0xff] %v554
        %714 = vst [vmem:[%s201 + $0x70] sm:$0xff] %v686
        %715 = vst [vmem:[%s201 + $0x78] sm:$0xff] %v556
        %716 = vst [vmem:[%s201 + $0x80] sm:$0xff] %v558
        %717 = vst [vmem:[%s201 + $0x88] sm:$0xff] %v689
        %718 = vst [vmem:[%s201 + $0x90] sm:$0xff] %v562
        %719 = vst [vmem:[%s201 + $0x98] sm:$0xff] %v564
        %720 = vst [vmem:[%s201 + $0xa0] sm:$0xff] %v694
        %721 = vst [vmem:[%s201 + $0xa8] sm:$0xff] %v566
        %722 = vst [vmem:[%s201 + $0xb0] sm:$0xff] %v568
        %723 = vst [vmem:[%s201 + $0xb8] sm:$0xff] %v697
        %s724 = sand.u32 %s91, 1
        %s725 = scalar_lea.sflag [#allocation4], %s724
        %s726 = sand.u32 %s91, 1
        %s727 = smul.addr %s726, 192
        %s728 = scalar_lea.vmem [#allocation7], %s727
        // Predicated region
        $region37: #{tpu_custom_call.1} parent=27 // pred_check
          %p729 = pneg %p101
        $region38: #{tpu_custom_call.1} parent=27 // pred_check_branch
          %731 = sbr.rel (%p729) target = $region40
        $region39: #{tpu_custom_call.1} parent=27 // pred_region
          %s732 = smul.u32 3, %s25
          %s733 = ssub.s32 5, %s732
          %p734 = scmp.lt.s32.totalorder %s733, 3
          %s735 = scalar_select %p734, %s733, 3
          %s736 = smul.u32 1024, %s735
          %s738 = ssub.s32 3072, %s736
          %739 = vsyncadd %s725, %s738
          %p740 = scmp.ne.s32.totalorder 0, %s736
          %s741 = smul.addr %s24, 40
          %s742 = sadd.s32 %s732, %s741
          %s743 = smul.addr %s742, 128
          %s744 = scalar_lea.hbm %s2, %s743
          %s745 = smul.u32 %s735, 8
          %s746 = smul.u32 %s745, 8
          %s747 = sshll.u32 %s728, 4
          %s748 = int_to_ptr.vmem [resolvable:$true] %s747
          %s749 = sshll.u32 %s746, 4
          %753 = dma.vmem_to_hbm [thread:$0]  (%p740), %s748, %s749, %s744, %s725, 384, 640, %s745
        $region40: #{tpu_custom_call.1} parent=27 // pred_fallthru
          _
      $region28: #{tpu_custom_call.1} parent=5 // pred_fallthru
        _
      %p754 = scmp.le.s32.totalorder 2, %s15
      // Predicated region
      $region41: #{tpu_custom_call.1} parent=5 // pred_check
        %p755 = pneg %p754
      $region42: #{tpu_custom_call.1} parent=5 // pred_check_branch
        %757 = sbr.rel (%p755) target = $region44
      $region43: #{tpu_custom_call.1} parent=5 // pred_region
        %s758 = ssub.s32 %s15, 2
        // Predicated region
        $region45: #{tpu_custom_call.1} parent=43 // pred_check
          %p759 = pneg %p107
        $region46: #{tpu_custom_call.1} parent=43 // pred_check_branch
          %761 = sbr.rel (%p759) target = $region48
        $region47: #{tpu_custom_call.1} parent=43 // pred_region
          %s762 = sand.u32 %s92, 1
          %s763 = scalar_lea.sflag [#allocation4], %s762
          %s764 = sand.u32 %s92, 1
          %s765 = smul.addr %s764, 192
          %s766 = scalar_lea.vmem [#allocation7], %s765
          %767 = dma.done %s763, 3072
        $region48: #{tpu_custom_call.1} parent=43 // pred_fallthru
          _
      $region44: #{tpu_custom_call.1} parent=5 // pred_fallthru
        _
    $region6: #{tpu_custom_call.1} parent=1 // loop_footer
      %s19 = sadd.s32 1, %s15
    $region7: #{tpu_custom_call.1} parent=1 // loop_footer_branch
      %14 = sbr.rel target = $region3
    $region8: #{tpu_custom_call.1} parent=1 // loop_exit
      _
    %768 = vsyncpa [#allocation3], 1
    %s769 = scalar_lea.sflag [#allocation3], 1
    %770 = vsyncpa %s769, 1
    %771 = vsyncpa [#allocation6], 1
    %s772 = scalar_lea.sflag [#allocation6], 1
    %773 = vsyncpa %s772, 1
    %774 = vsyncpa [#allocation4], 1
    %s775 = scalar_lea.sflag [#allocation4], 1
    %776 = vsyncpa %s775, 1

</llo_original>
